<compile_context>
chip_gen: v7x
topology: tpu7x:2x2x1
jax: 0.10.0
libtpu: 0.0.40
codegen_flags: <defaults>
</compile_context>

<pallas_src>
import functools

import numpy as np

import jax
import jax.numpy as jnp
from jax import lax
from jax.experimental import pallas as pl
from jax.experimental.pallas import tpu as pltpu


def _round_up(x, m):
    return (x + m - 1) // m * m


def _focal_kernel(logit_ref, tgt_ref, out_ref, acc_ref, *,
                  C, gamma, smooth, alpha, hw, r_tile, need_mask):
    t = pl.program_id(1)

    @pl.when(t == 0)
    def _():
        acc_ref[...] = jnp.zeros_like(acc_ref)

    tgt = tgt_ref[0, 0]                                     # (r_tile, 128) int32

    # ---- Pass 1 (fused): running max over classes + one-hot gather of the
    # target-class logit.  C is small and static -> fully unrolled VPU ops.
    row0 = logit_ref[0, 0].astype(jnp.float32)              # (r_tile, 128)
    m = row0
    logit_t = row0
    for c in range(1, C):
        row = logit_ref[0, c].astype(jnp.float32)
        m = jnp.maximum(m, row)
        logit_t = jnp.where(tgt == c, row, logit_t)

    # ---- Pass 2: sum of exp(logit - m).  Rows are re-read from VMEM (cheap
    # vld) instead of being kept live, so the vreg working set stays small.
    s = jnp.exp(logit_ref[0, 0].astype(jnp.float32) - m)
    for c in range(1, C):
        s = s + jnp.exp(logit_ref[0, c].astype(jnp.float32) - m)

    # log-sum-exp form: p_t = softmax(logits)[target]
    lse = m + jnp.log(s)
    p_t = jnp.exp(logit_t - lse) + smooth
    logpt = jnp.log(p_t)

    one_minus = 1.0 - p_t
    g = float(gamma)
    if g == 2.0:
        w = one_minus * one_minus                            # single VPU multiply
    elif g.is_integer():
        w = lax.integer_pow(one_minus, int(g))
    else:
        # TODO(synk): non-integer gamma lowers to exp(g*log(x)) on the EUP and
        # NaNs when p_t > 1 (matches the PyTorch reference behavior).
        w = one_minus ** g

    if all(a == 1.0 for a in alpha):
        loss = -(w * logpt)                                  # alpha == ones fast path
    else:
        a_t = jnp.full_like(m, alpha[0])
        for c in range(1, C):
            a_t = jnp.where(tgt == c, jnp.float32(alpha[c]), a_t)
        loss = -(a_t * w * logpt)

    last = pl.num_programs(1) - 1
    if need_mask:
        # Only the final block can contain invalid (padded / OOB-garbage)
        # pixels; keep the mask as a select (NOT a multiply) so inf/NaN from
        # garbage reads is dropped cleanly.
        @pl.when(t != last)
        def _():
            acc_ref[...] += loss

        @pl.when(t == last)
        def _():
            r = lax.broadcasted_iota(jnp.int32, loss.shape, 0)
            l = lax.broadcasted_iota(jnp.int32, loss.shape, 1)
            px = (t * r_tile + r) * 128 + l
            acc_ref[...] += jnp.where(px < hw, loss, 0.0)
    else:
        acc_ref[...] += loss

    @pl.when(t == last)
    def _():
        # single cross-lane reduction per image
        out_ref[...] = jnp.sum(acc_ref[...]).reshape(1, 1, 1)


def focal_loss_pallas(logit, target, alpha=None, *, gamma=2, smooth=1e-4,
                      max_rows_per_step=1024,
                      vmem_budget_bytes=24 * 1024 * 1024):
    """FocalLoss forward, reduction='mean', ignore_index=None.

    logit:  (N, C, *spatial)  float (f32 or bf16; upcast in-kernel)
    target: (N, *spatial)     integer class indices
    alpha:  None | scalar | array-like of length C (static module config)
    """
    N, C = int(logit.shape[0]), int(logit.shape[1])
    HW = 1
    for d in logit.shape[2:]:
        HW *= int(d)

    if alpha is None:
        alpha_vals = (1.0,) * C
    elif isinstance(alpha, (int, float)):
        alpha_vals = (float(alpha),) * C
    else:
        a = np.asarray(alpha, dtype=np.float32).reshape(-1)
        if a.shape[0] != C:
            raise RuntimeError('the length not equal to number of class')
        alpha_vals = tuple(float(v) for v in a)

    logits3 = logit.reshape(N, C, HW)                        # native order, no transpose
    target3 = target.reshape(N, 1, HW).astype(jnp.int32)

    # Pad the pixel axis only up to the next multiple of the lane width (128).
    # For typical segmentation shapes HW % 128 == 0 and this is a no-op.
    HW128 = _round_up(HW, 128)
    if HW128 != HW:
        # TODO(synk): this small pad still copies the tensor once in HBM; a
        # 3-D fallback path could avoid it for odd spatial sizes.
        pad = HW128 - HW
        logits3 = jnp.pad(logits3, ((0, 0), (0, 0), (0, pad)))
        target3 = jnp.pad(target3, ((0, 0), (0, 0), (0, pad)))
    R = HW128 // 128

    # Sublane-dense 4-D view: pixels -> (rows, 128 lanes).  Row-major reshape,
    # so this is layout plumbing only (no data movement).
    logits4 = logits3.reshape(N, C, R, 128)
    target4 = target3.reshape(N, 1, R, 128)

    # Rows per grid step: as many as fit the double-buffered VMEM budget.
    itemsize = int(np.dtype(logits4.dtype).itemsize)
    bytes_per_row = (C * itemsize + 4) * 128                 # logit row + target row
    r_tile = max(8, min(int(max_rows_per_step),
                        int(vmem_budget_bytes) // (2 * bytes_per_row)))
    r_tile = (r_tile // 8) * 8
    if r_tile >= R:
        r_tile = R                                           # full-dim block is always legal
    n_t = pl.cdiv(R, r_tile)                                 # partial last block OK (masked)

    need_mask = (HW128 != HW) or (R % r_tile != 0)
    grid = (N, n_t)

    # Explicit VMEM limit (v5e scoped default is only 16 MiB; v7x physical 64 MiB).
    block_bytes = bytes_per_row * r_tile
    vmem_needed = 2 * block_bytes + r_tile * 128 * 4
    vmem_limit = int(min(48 * 1024 * 1024,
                         max(16 * 1024 * 1024, 2 * vmem_needed)))

    kernel = functools.partial(
        _focal_kernel, C=C, gamma=gamma, smooth=float(smooth),
        alpha=alpha_vals, hw=HW, r_tile=r_tile, need_mask=need_mask)

    partials = pl.pallas_call(
        kernel,
        out_shape=jax.ShapeDtypeStruct((N, 1, 1), jnp.float32),
        grid_spec=pltpu.PrefetchScalarGridSpec(
            num_scalar_prefetch=0,
            grid=grid,
            in_specs=[
                pl.BlockSpec((1, C, r_tile, 128), lambda n, t: (n, 0, t, 0)),
                pl.BlockSpec((1, 1, r_tile, 128), lambda n, t: (n, 0, t, 0)),
            ],
            out_specs=pl.BlockSpec((1, 1, 1), lambda n, t: (n, 0, 0)),
            scratch_shapes=[pltpu.VMEM((r_tile, 128), jnp.float32)],
        ),
        compiler_params=pltpu.CompilerParams(
            dimension_semantics=("parallel", "arbitrary"),
            vmem_limit_bytes=vmem_limit),
    )(logits4, target4)

    return jnp.sum(partials) / float(N * HW)


def focal_loss_ref(logit_nchw, target_nhw, alpha, *, gamma=2, smooth=1e-4):
    """Pure-JAX reference mirroring the PyTorch forward."""
    N, C = logit_nchw.shape[:2]
    prob = jax.nn.softmax(logit_nchw.astype(jnp.float32), axis=1)
    prob = jnp.transpose(prob.reshape(N, C, -1), (0, 2, 1)).reshape(-1, C)
    tgt = target_nhw.reshape(-1)
    p_t = jnp.take_along_axis(prob, tgt[:, None], axis=1)[:, 0] + smooth
    logpt = jnp.log(p_t)
    a_t = alpha.astype(jnp.float32)[tgt]
    loss = -a_t * (1.0 - p_t) ** gamma * logpt
    return jnp.mean(loss)


if __name__ == "__main__":
    num_class = 4
    N, C, H, W = 2, num_class, 16, 16

    key = jax.random.PRNGKey(0)
    k1, k2 = jax.random.split(key)
    logit = jax.random.normal(k1, (N, C, H, W), dtype=jnp.float32)
    target = jax.random.randint(k2, (N, H, W), 0, num_class, dtype=jnp.int32)

    # FocalLoss(num_class, alpha=None) -> alpha = ones(num_class)
    alpha = jnp.ones((num_class,), dtype=jnp.float32)

    out = focal_loss_pallas(logit, target, alpha, gamma=2, smooth=1e-4)
    out = jax.block_until_ready(out)

    ref = focal_loss_ref(logit, target, alpha, gamma=2, smooth=1e-4)
    assert jnp.allclose(out, ref, rtol=1e-5, atol=1e-5), (out, ref)

    print("KERNEL_OK")
</pallas_src>

<mosaic_0001>
module attributes {stable_mosaic.version = 11 : i64} {
  func.func @_focal_kernel(%arg0: i32, %arg1: i32, %arg2: memref<1x4x2x128xf32, #tpu.memory_space<vmem>>, %arg3: memref<1x1x2x128xi32, #tpu.memory_space<vmem>>, %arg4: memref<1x1x1xf32, #tpu.memory_space<vmem>>, %arg5: memref<2x128xf32, #tpu.memory_space<vmem>>) attributes {dimension_semantics = [#tpu.dimension_semantics<parallel>, #tpu.dimension_semantics<arbitrary>], iteration_bounds = array<i64: 2, 1>, scalar_prefetch = 0 : i64, scratch_operands = 1 : i64, tpu.core_type = #tpu.core_type<tc>, window_params = [{transform_indices = @transform_0, window_bounds = array<i64: 1, 4, 2, 128>}, {transform_indices = @transform_1, window_bounds = array<i64: 1, 1, 2, 128>}, {transform_indices = @transform_2, window_bounds = array<i64: 1, 1, 1>}]} {
    %c0_i32 = arith.constant 0 : i32
    %0 = arith.cmpi eq, %arg1, %c0_i32 : i32
    %1 = arith.extui %0 : i1 to i32
    %c0_i32_0 = arith.constant 0 : i32
    %2 = arith.cmpi ne, %1, %c0_i32_0 : i32
    scf.if %2 {
      %cst_41 = arith.constant 0.000000e+00 : f32
      %63 = vector.broadcast %cst_41 : f32 to vector<2x128xf32>
      %c0_42 = arith.constant 0 : index
      %c0_43 = arith.constant 0 : index
      %64 = vector.load %arg5[%c0_42, %c0_43] : memref<2x128xf32, #tpu.memory_space<vmem>>, vector<2x128xf32>
      tpu.vector_store %arg5[%c0_42, %c0_43], %63 {strides = array<i32>} : memref<2x128xf32, #tpu.memory_space<vmem>>, vector<2x128xf32>,
    } else {
    }
    %c0 = arith.constant 0 : index
    %c0_1 = arith.constant 0 : index
    %c0_2 = arith.constant 0 : index
    %c0_3 = arith.constant 0 : index
    %3 = vector.load %arg3[%c0, %c0_1, %c0_2, %c0_3] : memref<1x1x2x128xi32, #tpu.memory_space<vmem>>, vector<1x1x2x128xi32>
    %4 = vector.shape_cast %3 : vector<1x1x2x128xi32> to vector<2x128xi32>
    %c0_4 = arith.constant 0 : index
    %c0_5 = arith.constant 0 : index
    %c0_6 = arith.constant 0 : index
    %c0_7 = arith.constant 0 : index
    %5 = vector.load %arg2[%c0_4, %c0_5, %c0_6, %c0_7] : memref<1x4x2x128xf32, #tpu.memory_space<vmem>>, vector<1x1x2x128xf32>
    %6 = vector.shape_cast %5 : vector<1x1x2x128xf32> to vector<2x128xf32>
    %c0_8 = arith.constant 0 : index
    %c1 = arith.constant 1 : index
    %c0_9 = arith.constant 0 : index
    %c0_10 = arith.constant 0 : index
    %7 = vector.load %arg2[%c0_8, %c1, %c0_9, %c0_10] : memref<1x4x2x128xf32, #tpu.memory_space<vmem>>, vector<1x1x2x128xf32>
    %8 = vector.shape_cast %7 : vector<1x1x2x128xf32> to vector<2x128xf32>
    %9 = arith.maximumf %6, %8 : vector<2x128xf32>
    %c1_i32 = arith.constant 1 : i32
    %10 = vector.broadcast %c1_i32 : i32 to vector<2x128xi32>
    %11 = arith.cmpi eq, %4, %10 : vector<2x128xi32>
    %12 = arith.select %11, %8, %6 : vector<2x128xi1>, vector<2x128xf32>
    %c0_11 = arith.constant 0 : index
    %c2 = arith.constant 2 : index
    %c0_12 = arith.constant 0 : index
    %c0_13 = arith.constant 0 : index
    %13 = vector.load %arg2[%c0_11, %c2, %c0_12, %c0_13] : memref<1x4x2x128xf32, #tpu.memory_space<vmem>>, vector<1x1x2x128xf32>
    %14 = vector.shape_cast %13 : vector<1x1x2x128xf32> to vector<2x128xf32>
    %15 = arith.maximumf %9, %14 : vector<2x128xf32>
    %c2_i32 = arith.constant 2 : i32
    %16 = vector.broadcast %c2_i32 : i32 to vector<2x128xi32>
    %17 = arith.cmpi eq, %4, %16 : vector<2x128xi32>
    %18 = arith.select %17, %14, %12 : vector<2x128xi1>, vector<2x128xf32>
    %c0_14 = arith.constant 0 : index
    %c3 = arith.constant 3 : index
    %c0_15 = arith.constant 0 : index
    %c0_16 = arith.constant 0 : index
    %19 = vector.load %arg2[%c0_14, %c3, %c0_15, %c0_16] : memref<1x4x2x128xf32, #tpu.memory_space<vmem>>, vector<1x1x2x128xf32>
    %20 = vector.shape_cast %19 : vector<1x1x2x128xf32> to vector<2x128xf32>
    %21 = arith.maximumf %15, %20 : vector<2x128xf32>
    %c3_i32 = arith.constant 3 : i32
    %22 = vector.broadcast %c3_i32 : i32 to vector<2x128xi32>
    %23 = arith.cmpi eq, %4, %22 : vector<2x128xi32>
    %24 = arith.select %23, %20, %18 : vector<2x128xi1>, vector<2x128xf32>
    %c0_17 = arith.constant 0 : index
    %c0_18 = arith.constant 0 : index
    %c0_19 = arith.constant 0 : index
    %c0_20 = arith.constant 0 : index
    %25 = vector.load %arg2[%c0_17, %c0_18, %c0_19, %c0_20] : memref<1x4x2x128xf32, #tpu.memory_space<vmem>>, vector<1x1x2x128xf32>
    %26 = vector.shape_cast %25 : vector<1x1x2x128xf32> to vector<2x128xf32>
    %27 = arith.subf %26, %21 : vector<2x128xf32>
    %28 = math.exp %27 : vector<2x128xf32>
    %c0_21 = arith.constant 0 : index
    %c1_22 = arith.constant 1 : index
    %c0_23 = arith.constant 0 : index
    %c0_24 = arith.constant 0 : index
    %29 = vector.load %arg2[%c0_21, %c1_22, %c0_23, %c0_24] : memref<1x4x2x128xf32, #tpu.memory_space<vmem>>, vector<1x1x2x128xf32>
    %30 = vector.shape_cast %29 : vector<1x1x2x128xf32> to vector<2x128xf32>
    %31 = arith.subf %30, %21 : vector<2x128xf32>
    %32 = math.exp %31 : vector<2x128xf32>
    %33 = arith.addf %28, %32 : vector<2x128xf32>
    %c0_25 = arith.constant 0 : index
    %c2_26 = arith.constant 2 : index
    %c0_27 = arith.constant 0 : index
    %c0_28 = arith.constant 0 : index
    %34 = vector.load %arg2[%c0_25, %c2_26, %c0_27, %c0_28] : memref<1x4x2x128xf32, #tpu.memory_space<vmem>>, vector<1x1x2x128xf32>
    %35 = vector.shape_cast %34 : vector<1x1x2x128xf32> to vector<2x128xf32>
    %36 = arith.subf %35, %21 : vector<2x128xf32>
    %37 = math.exp %36 : vector<2x128xf32>
    %38 = arith.addf %33, %37 : vector<2x128xf32>
    %c0_29 = arith.constant 0 : index
    %c3_30 = arith.constant 3 : index
    %c0_31 = arith.constant 0 : index
    %c0_32 = arith.constant 0 : index
    %39 = vector.load %arg2[%c0_29, %c3_30, %c0_31, %c0_32] : memref<1x4x2x128xf32, #tpu.memory_space<vmem>>, vector<1x1x2x128xf32>
    %40 = vector.shape_cast %39 : vector<1x1x2x128xf32> to vector<2x128xf32>
    %41 = arith.subf %40, %21 : vector<2x128xf32>
    %42 = math.exp %41 : vector<2x128xf32>
    %43 = arith.addf %38, %42 : vector<2x128xf32>
    %44 = math.log %43 : vector<2x128xf32>
    %45 = arith.addf %21, %44 : vector<2x128xf32>
    %46 = arith.subf %24, %45 : vector<2x128xf32>
    %47 = math.exp %46 : vector<2x128xf32>
    %cst = arith.constant 9.99999974E-5 : f32
    %48 = vector.broadcast %cst : f32 to vector<2x128xf32>
    %49 = arith.addf %47, %48 : vector<2x128xf32>
    %50 = math.log %49 : vector<2x128xf32>
    %cst_33 = arith.constant 1.000000e+00 : f32
    %51 = vector.broadcast %cst_33 : f32 to vector<2x128xf32>
    %52 = arith.subf %51, %49 : vector<2x128xf32>
    %53 = arith.mulf %52, %52 : vector<2x128xf32>
    %54 = arith.mulf %53, %50 : vector<2x128xf32>
    %cst_34 = arith.constant 0.000000e+00 : f32
    %55 = vector.broadcast %cst_34 : f32 to vector<2x128xf32>
    %56 = arith.subf %55, %54 : vector<2x128xf32>
    %c0_35 = arith.constant 0 : index
    %c0_36 = arith.constant 0 : index
    %57 = vector.load %arg5[%c0_35, %c0_36] : memref<2x128xf32, #tpu.memory_space<vmem>>, vector<2x128xf32>
    %58 = arith.addf %57, %56 : vector<2x128xf32>
    %c0_37 = arith.constant 0 : index
    %c0_38 = arith.constant 0 : index
    %59 = vector.load %arg5[%c0_37, %c0_38] : memref<2x128xf32, #tpu.memory_space<vmem>>, vector<2x128xf32>
    tpu.vector_store %arg5[%c0_37, %c0_38], %58 {strides = array<i32>} : memref<2x128xf32, #tpu.memory_space<vmem>>, vector<2x128xf32>,
    %c0_i32_39 = arith.constant 0 : i32
    %60 = arith.cmpi eq, %arg1, %c0_i32_39 : i32
    %61 = arith.extui %60 : i1 to i32
    %c0_i32_40 = arith.constant 0 : i32
    %62 = arith.cmpi ne, %61, %c0_i32_40 : i32
    scf.if %62 {
      %c0_41 = arith.constant 0 : index
      %c0_42 = arith.constant 0 : index
      %63 = vector.load %arg5[%c0_41, %c0_42] : memref<2x128xf32, #tpu.memory_space<vmem>>, vector<2x128xf32>
      %64 = vector.shape_cast %63 : vector<2x128xf32> to vector<1x2x128xf32>
      %cst_43 = arith.constant dense<0.000000e+00> : vector<1xf32>
      %65 = vector.multi_reduction <add>, %64, %cst_43 [1, 2] : vector<1x2x128xf32> to vector<1xf32>
      %66 = vector.shape_cast %65 : vector<1xf32> to vector<1x1x1xf32>
      %67 = vector.extract %66[0, 0, 0] : f32 from vector<1x1x1xf32>
      %68 = vector.broadcast %67 : f32 to vector<1x1x1xf32>
      %c0_44 = arith.constant 0 : index
      %c0_45 = arith.constant 0 : index
      %c0_46 = arith.constant 0 : index
      %69 = vector.load %arg4[%c0_44, %c0_45, %c0_46] : memref<1x1x1xf32, #tpu.memory_space<vmem>>, vector<1x1x1xf32>
      tpu.vector_store %arg4[%c0_44, %c0_45, %c0_46], %68 {strides = array<i32>} : memref<1x1x1xf32, #tpu.memory_space<vmem>>, vector<1x1x1xf32>,
    } else {
    }
    return
  }
  func.func @transform_0(%arg0: i32, %arg1: i32) -> (i32, i32, i32, i32) {
    %c0_i32 = arith.constant 0 : i32
    %c0_i32_0 = arith.constant 0 : i32
    %c0_i32_1 = arith.constant 0 : i32
    return %arg0, %c0_i32, %arg1, %c0_i32_0 : i32, i32, i32, i32
  }
  func.func @transform_1(%arg0: i32, %arg1: i32) -> (i32, i32, i32, i32) {
    %c0_i32 = arith.constant 0 : i32
    %c0_i32_0 = arith.constant 0 : i32
    %c0_i32_1 = arith.constant 0 : i32
    return %arg0, %c0_i32, %arg1, %c0_i32_0 : i32, i32, i32, i32
  }
  func.func @transform_2(%arg0: i32, %arg1: i32) -> (i32, i32, i32) {
    %c0_i32 = arith.constant 0 : i32
    %c0_i32_0 = arith.constant 0 : i32
    %c0_i32_1 = arith.constant 0 : i32
    return %arg0, %c0_i32, %c0_i32_0 : i32, i32, i32
  }
}

</mosaic_0001>

<llo_original>
// kernel: tpu_custom_call.1
$region0: #{tpu_custom_call.1}
  #allocation0 [shape = 'u32[]', space=smem, size = 0x4, offset = 0x4, fixed_abs, tag = 'smem constant byte address 0x4 - core index']
  #allocation1 [shape = 'u32[144,128]{1,0:T(1,128)}', space=vmem, size = 0x12000, scoped, tag = 'internal scratch']
  #allocation2 [shape = 'f32[2,128]{1,0:T(2,128)}', space=vmem, size = 0x400, scoped, tag = 'scratch operand']
  %s0 = inlined_call_operand.hbm [shape: f32[2,4,2,128], index: 0, kind: input, shape index: {}]
  %s1 = inlined_call_operand.hbm [shape: s32[2,1,2,128], index: 1, kind: input, shape index: {}]
  %s2 = inlined_call_operand.vmem [shape: f32[2,1,1], index: 2, kind: output, shape index: {}]
  %s3 = sld [smem:[#allocation0]]
  $region57: #{tpu_custom_call.1} parent=0
    _
  %s5 = ssub.s32 1, %s3
  %s6 = scalar_select 0, %s5, %s3
  $region1: #{tpu_custom_call.1} parent=0
    #allocation3 [shape = 'u8[8192]{0}', space=vmem, size = 0x2000, scoped, tag = 'input window, operand 0']
    #allocation4 [shape = 's32[2]{0}', space=sflag, size = 0x8, scoped, tag = 'scoped memory for tpu_custom_call.1']
    #allocation5 [shape = 'u8[2048]{0}', space=vmem, size = 0x800, scoped, tag = 'input window, operand 1']
    #allocation6 [shape = 's32[2]{0}', space=sflag, size = 0x8, scoped, tag = 'scoped memory for tpu_custom_call.1']
    %7 = vsyncpa [#allocation4], 0
    %s8 = scalar_lea.sflag [#allocation4], 1
    %9 = vsyncpa %s8, 0
    %10 = vsyncpa [#allocation6], 0
    %s11 = scalar_lea.sflag [#allocation6], 1
    %12 = vsyncpa %s11, 0
    loop: start=0, step=1, limit=4
    $region2: #{tpu_custom_call.1} parent=1 // loop_pre_header
      _
    $region3: #{tpu_custom_call.1} parent=1 // loop_header
      %s14 = sphi 0, %s18
      %p15 = scmp.ge.s32.totalorder %s14, 4
      %s21 = sphi 0, %s33
      %s22 = sphi 0, %s29
      %s23 = sphi 0, %s21
      %s24 = sphi 0, %s22
      %s25 = sphi 0, %s23
      %s26 = sphi 0, %s24
      %s38 = sphi 0, %s40
      %s41 = sphi 0, %s38
      %s42 = sphi 0, %s41
      %s58 = sphi 0, %s42
      %s66 = sphi 0, %s68
      %s69 = sphi 0, %s66
      %s70 = sphi 0, %s69
      %s86 = sphi 0, %s70
      %s92 = sphi 0, %s94
      %s95 = sphi 0, %s92
      %s96 = sphi 0, %s95
      %s112 = sphi 0, %s96
    $region4: #{tpu_custom_call.1} parent=1 // loop_header_branch
      %17 = sbr.rel (%p15) target = $region8
    $region5: #{tpu_custom_call.1} parent=1 // loop_body
      %s19 = ssub.s32 %s14, 1
      %s20 = ssub.s32 %s14, 2
      %s27 = sadd.s32 1, %s22
      %p28 = scmp.ge.s32.totalorder %s27, 1
      %s29 = scalar_select %p28, 0, %s27
      %s30 = sadd.s32 1, %s21
      %s31 = scalar_select %p28, %s30, %s21
      %p32 = scmp.ge.s32.totalorder %s31, 2
      %s33 = scalar_select %p32, 0, %s31
      %s34 = ssub.s32 %s21, %s33
      %s35 = ssub.s32 %s22, %s29
      %s36 = sor.u32 %s34, %s35
      %p37 = scmp.eq.s32.totalorder %s36, 0
      %s39 = sadd.s32 %s38, 1
      %s40 = scalar_select %p37, %s38, %s39
      %p43 = pneg %p37
      %p44 = scmp.eq.s32.totalorder %s14, 1
      %p45 = por %p43, %p44
      %p46 = scmp.ne.s32.totalorder %s38, %s41
      %p47 = scmp.eq.s32.totalorder %s14, 0
      %p48 = por %p46, %p47
      %p49 = scmp.ne.s32.totalorder %s38, %s41
      %p50 = scmp.eq.s32.totalorder %s19, 1
      %p51 = por %p49, %p50
      %p52 = scmp.ne.s32.totalorder %s41, %s42
      %p53 = scmp.eq.s32.totalorder %s19, 0
      %p54 = por %p52, %p53
      %p55 = scmp.ne.s32.totalorder %s41, %s42
      %p56 = scmp.eq.s32.totalorder %s20, 1
      %p57 = por %p55, %p56
      %p59 = scmp.ne.s32.totalorder %s42, %s58
      %p60 = scmp.eq.s32.totalorder %s20, 0
      %p61 = por %p59, %p60
      %s62 = ssub.s32 %s21, %s33
      %s63 = ssub.s32 %s22, %s29
      %s64 = sor.u32 %s62, %s63
      %p65 = scmp.eq.s32.totalorder %s64, 0
      %s67 = sadd.s32 %s66, 1
      %s68 = scalar_select %p65, %s66, %s67
      %p71 = pneg %p65
      %p72 = scmp.eq.s32.totalorder %s14, 1
      %p73 = por %p71, %p72
      %p74 = scmp.ne.s32.totalorder %s66, %s69
      %p75 = scmp.eq.s32.totalorder %s14, 0
      %p76 = por %p74, %p75
      %p77 = scmp.ne.s32.totalorder %s66, %s69
      %p78 = scmp.eq.s32.totalorder %s19, 1
      %p79 = por %p77, %p78
      %p80 = scmp.ne.s32.totalorder %s69, %s70
      %p81 = scmp.eq.s32.totalorder %s19, 0
      %p82 = por %p80, %p81
      %p83 = scmp.ne.s32.totalorder %s69, %s70
      %p84 = scmp.eq.s32.totalorder %s20, 1
      %p85 = por %p83, %p84
      %p87 = scmp.ne.s32.totalorder %s70, %s86
      %p88 = scmp.eq.s32.totalorder %s20, 0
      %p89 = por %p87, %p88
      %s90 = ssub.s32 %s21, %s33
      %p91 = scmp.eq.s32.totalorder %s90, 0
      %s93 = sadd.s32 %s92, 1
      %s94 = scalar_select %p91, %s92, %s93
      %p97 = pneg %p91
      %p98 = scmp.eq.s32.totalorder %s14, 1
      %p99 = por %p97, %p98
      %p100 = scmp.ne.s32.totalorder %s92, %s95
      %p101 = scmp.eq.s32.totalorder %s14, 0
      %p102 = por %p100, %p101
      %p103 = scmp.ne.s32.totalorder %s92, %s95
      %p104 = scmp.eq.s32.totalorder %s19, 1
      %p105 = por %p103, %p104
      %p106 = scmp.ne.s32.totalorder %s95, %s96
      %p107 = scmp.eq.s32.totalorder %s19, 0
      %p108 = por %p106, %p107
      %p109 = scmp.ne.s32.totalorder %s95, %s96
      %p110 = scmp.eq.s32.totalorder %s20, 1
      %p111 = por %p109, %p110
      %p113 = scmp.ne.s32.totalorder %s96, %s112
      %p114 = scmp.eq.s32.totalorder %s20, 0
      %p115 = por %p113, %p114
      %p116 = scmp.le.s32.totalorder 1, %s14
      %p117 = scmp.lt.s32.totalorder %s14, 3
      %p118 = pnand %p116, %p117
      %p119 = pneg %p118
      // Predicated region
      $region9: #{tpu_custom_call.1} parent=5 // pred_check
        _
      $region10: #{tpu_custom_call.1} parent=5 // pred_check_branch
        %121 = sbr.rel (%p118) target = $region12
      $region11: #{tpu_custom_call.1} parent=5 // pred_region
        %s122 = ssub.s32 %s14, 1
      $region12: #{tpu_custom_call.1} parent=5 // pred_fallthru
        _
      %p123 = scmp.lt.s32.totalorder %s14, 2
      // Predicated region
      $region13: #{tpu_custom_call.1} parent=5 // pred_check
        %p124 = pneg %p123
      $region14: #{tpu_custom_call.1} parent=5 // pred_check_branch
        %126 = sbr.rel (%p124) target = $region16
      $region15: #{tpu_custom_call.1} parent=5 // pred_region
        // Predicated region
        $region17: #{tpu_custom_call.1} parent=15 // pred_check
          %p127 = pneg %p48
        $region18: #{tpu_custom_call.1} parent=15 // pred_check_branch
          %129 = sbr.rel (%p127) target = $region20
        $region19: #{tpu_custom_call.1} parent=15 // pred_region
          %s130 = sand.u32 %s38, 1
          %s131 = scalar_lea.sflag [#allocation4], %s130
          %s132 = sand.u32 %s38, 1
          %s133 = smul.addr %s132, 8
          %s134 = scalar_lea.vmem [#allocation3], %s133
          %s136 = ssub.s32 128, 128
          %137 = vsyncadd %s131, %s136
          %s138 = smul.addr %s21, 4
          %s139 = sadd.s32 %s22, %s138
          %s140 = smul.addr %s139, 32
          %s141 = scalar_lea.hbm %s0, %s140
          %s142 = sshll.u32 %s134, 4
          %s143 = int_to_ptr.vmem [resolvable:$true] %s142
          %148 = dma.hbm_to_vmem [thread:$0]  %s141, 128, %s143, %s131, 32, 32, 2
        $region20: #{tpu_custom_call.1} parent=15 // pred_fallthru
          _
        // Predicated region
        $region21: #{tpu_custom_call.1} parent=15 // pred_check
          %p149 = pneg %p76
        $region22: #{tpu_custom_call.1} parent=15 // pred_check_branch
          %151 = sbr.rel (%p149) target = $region24
        $region23: #{tpu_custom_call.1} parent=15 // pred_region
          %s152 = sand.u32 %s66, 1
          %s153 = scalar_lea.sflag [#allocation6], %s152
          %s154 = sand.u32 %s66, 1
          %s155 = smul.addr %s154, 2
          %s156 = scalar_lea.vmem [#allocation5], %s155
          %s158 = ssub.s32 32, 32
          %159 = vsyncadd %s153, %s158
          %s160 = sadd.s32 %s22, %s21
          %s161 = smul.addr %s160, 32
          %s162 = scalar_lea.hbm %s1, %s161
          %s164 = sshll.u32 %s156, 4
          %s165 = int_to_ptr.vmem [resolvable:$true] %s164
          %167 = dma.hbm_to_vmem [thread:$0]  %s162, 32, %s165, %s153
        $region24: #{tpu_custom_call.1} parent=15 // pred_fallthru
          _
      $region16: #{tpu_custom_call.1} parent=5 // pred_fallthru
        _
      %p168 = scmp.le.s32.totalorder 1, %s14
      %p169 = scmp.lt.s32.totalorder %s14, 3
      %p170 = pnand %p168, %p169
      %p171 = pneg %p170
      // Predicated region
      $region25: #{tpu_custom_call.1} parent=5 // pred_check
        _
      $region26: #{tpu_custom_call.1} parent=5 // pred_check_branch
        %173 = sbr.rel (%p170) target = $region28
      $region27: #{tpu_custom_call.1} parent=5 // pred_region
        %s174 = ssub.s32 %s14, 1
        %s175 = sand.u32 %s41, 1
        %s176 = scalar_lea.sflag [#allocation4], %s175
        %s177 = sand.u32 %s41, 1
        %s178 = smul.addr %s177, 8
        %s179 = scalar_lea.vmem [#allocation3], %s178
        // Predicated region
        $region29: #{tpu_custom_call.1} parent=27 // pred_check
          %p180 = pneg %p54
        $region30: #{tpu_custom_call.1} parent=27 // pred_check_branch
          %182 = sbr.rel (%p180) target = $region32
        $region31: #{tpu_custom_call.1} parent=27 // pred_region
          %183 = dma.done %s176, 128
        $region32: #{tpu_custom_call.1} parent=27 // pred_fallthru
          _
        %s184 = sand.u32 %s69, 1
        %s185 = scalar_lea.sflag [#allocation6], %s184
        %s186 = sand.u32 %s69, 1
        %s187 = smul.addr %s186, 2
        %s188 = scalar_lea.vmem [#allocation5], %s187
        // Predicated region
        $region33: #{tpu_custom_call.1} parent=27 // pred_check
          %p189 = pneg %p82
        $region34: #{tpu_custom_call.1} parent=27 // pred_check_branch
          %191 = sbr.rel (%p189) target = $region36
        $region35: #{tpu_custom_call.1} parent=27 // pred_region
          %192 = dma.done %s185, 32
        $region36: #{tpu_custom_call.1} parent=27 // pred_fallthru
          _
        %s193 = sand.u32 %s41, 1
        %s194 = scalar_lea.sflag [#allocation4], %s193
        %s195 = sand.u32 %s41, 1
        %s196 = smul.addr %s195, 8
        %s197 = scalar_lea.vmem [#allocation3], %s196
        %p198 = pneg %p54
        %p199 = pneg %p51
        %s200 = sand.u32 %s69, 1
        %s201 = scalar_lea.sflag [#allocation6], %s200
        %s202 = sand.u32 %s69, 1
        %s203 = smul.addr %s202, 2
        %s204 = scalar_lea.vmem [#allocation5], %s203
        %p205 = pneg %p82
        %p206 = pneg %p79
        %p207 = pneg %p108
        %p208 = pneg %p105
        %p209 = scmp.lt.s32.totalorder %s23, 1
        %s210 = scalar_select %p209, %s23, 1
        %s211 = scalar_lea.vmem %s2, %s210
        %p212 = scmp.lt.s32.totalorder %s23, 1
        %s213 = scalar_select %p212, %s23, 1
        %s214 = scalar_lea.vmem %s2, %s213
        %p215 = scmp.eq.s32.totalorder %s24, 0
        // Predicated region
        $region37: #{tpu_custom_call.1} parent=27 // pred_check
          %p216 = pneg %p215
        $region38: #{tpu_custom_call.1} parent=27 // pred_check_branch
          %218 = sbr.rel (%p216) target = $region40
        $region39: #{tpu_custom_call.1} parent=27 // pred_region
          %219 = vst [vmem:[#allocation2] sm:$0x3] 0.0
        $region40: #{tpu_custom_call.1} parent=27 // pred_fallthru
          _
        %v220 = vld [vmem:[%s188] sm:$0x3]
        %v221 = vld [vmem:[%s179] sm:$0x3]
        %s222 = scalar_lea.vmem %s179, 2 [#allocation3]
        %v223 = vld [vmem:[%s222] sm:$0x3]
        %v224 = vmax.f32 %v221, %v223
        %vm225 = vcmp.eq.s32.totalorder %v220, 1
        %v226 = vsel %vm225, %v223, %v221
        %s227 = scalar_lea.vmem %s179, 4 [#allocation3]
        %v228 = vld [vmem:[%s227] sm:$0x3]
        %v229 = vmax.f32 %v224, %v228
        %vm230 = vcmp.eq.s32.totalorder %v220, 2
        %v231 = vsel %vm230, %v228, %v226
        %s232 = scalar_lea.vmem %s179, 6 [#allocation3]
        %v233 = vld [vmem:[%s232] sm:$0x3]
        %v234 = vmax.f32 %v229, %v233
        %vm235 = vcmp.eq.s32.totalorder %v220, 3
        %v236 = vsel %vm235, %v233, %v231
        %v237 = vsub.f32 %v221, %v234
        %v238 = vmul.f32 %v237, 1.442695
        %v239 = vpow.pop %v238
        %v240 = vsub.f32 %v223, %v234
        %v241 = vmul.f32 %v240, 1.442695
        %v242 = vpow.pop %v241
        %v243 = vadd.f32 %v239, %v242
        %v244 = vsub.f32 %v228, %v234
        %v245 = vmul.f32 %v244, 1.442695
        %v246 = vpow.pop %v245
        %v247 = vadd.f32 %v243, %v246
        %v248 = vsub.f32 %v233, %v234
        %v249 = vmul.f32 %v248, 1.442695
        %v250 = vpow.pop %v249
        %v251 = vadd.f32 %v247, %v250
        %v252 = vlog2.pop %v251
        %v253 = vmul.f32 %v252, 0.6931472
        %v254 = vadd.f32 %v234, %v253
        %v255 = vsub.f32 %v236, %v254
        %v256 = vmul.f32 %v255, 1.442695
        %v257 = vpow.pop %v256
        %v258 = vadd.f32 %v257, 0.0001
        %v259 = vlog2.pop %v258
        %v260 = vmul.f32 %v259, 0.6931472
        %v261 = vsub.f32 1.0, %v258
        %v262 = vmul.f32 %v261, %v261
        %v263 = vmul.f32 %v262, %v260
        %v264 = vsub.f32 0.0, %v263
        %v265 = vld [vmem:[#allocation2] sm:$0x3]
        %v266 = vadd.f32 %v265, %v264
        %267 = vst [vmem:[#allocation2] sm:$0x3] %v266
        // Predicated region
        $region41: #{tpu_custom_call.1} parent=27 // pred_check
          %p268 = pneg %p215
        $region42: #{tpu_custom_call.1} parent=27 // pred_check_branch
          %270 = sbr.rel (%p268) target = $region44
        $region43: #{tpu_custom_call.1} parent=27 // pred_region
          %v271 = vld [vmem:[#allocation2] sm:$0x3]
          %vm272 = vcmask 1041408
          %v273 = vsel %vm272, %v271, 0.0
          %274 = vadd.xlane.f32.xlu0 %v273
          %v275 = vpop.xlane.xlu0 %274
          %v276 = vrot.slane %v275, 4
          %v277 = vadd.f32 %v275, %v276
          %v278 = vrot.slane %v277, 2
          %v279 = vadd.f32 %v277, %v278
          %v280 = vrot.slane %v279, 1
          %v281 = vadd.f32 %v279, %v280
          %s282 = vtos %v281
          %v283 = vstv %s282
          %vm284 = vcmask 0
          %285 = vst.msk [vmem:[%s214] sm:$0x1] %vm284, %v283
        $region44: #{tpu_custom_call.1} parent=27 // pred_fallthru
          _
        %p286 = scmp.lt.s32.totalorder %s23, 1
        %s287 = scalar_select %p286, %s23, 1
        %s288 = scalar_lea.vmem %s2, %s287
        // Predicated region
        $region45: #{tpu_custom_call.1} parent=27 // pred_check
          %p289 = pneg %p105
        $region46: #{tpu_custom_call.1} parent=27 // pred_check_branch
          %291 = sbr.rel (%p289) target = $region48
        $region47: #{tpu_custom_call.1} parent=27 // pred_region
          _
        $region48: #{tpu_custom_call.1} parent=27 // pred_fallthru
          _
      $region28: #{tpu_custom_call.1} parent=5 // pred_fallthru
        _
      %p292 = scmp.le.s32.totalorder 2, %s14
      // Predicated region
      $region49: #{tpu_custom_call.1} parent=5 // pred_check
        %p293 = pneg %p292
      $region50: #{tpu_custom_call.1} parent=5 // pred_check_branch
        %295 = sbr.rel (%p293) target = $region52
      $region51: #{tpu_custom_call.1} parent=5 // pred_region
        %s296 = ssub.s32 %s14, 2
        // Predicated region
        $region53: #{tpu_custom_call.1} parent=51 // pred_check
          %p297 = pneg %p111
        $region54: #{tpu_custom_call.1} parent=51 // pred_check_branch
          %299 = sbr.rel (%p297) target = $region56
        $region55: #{tpu_custom_call.1} parent=51 // pred_region
          %p300 = scmp.lt.s32.totalorder %s25, 1
          %s301 = scalar_select %p300, %s25, 1
          %s302 = scalar_lea.vmem %s2, %s301
        $region56: #{tpu_custom_call.1} parent=51 // pred_fallthru
          _
      $region52: #{tpu_custom_call.1} parent=5 // pred_fallthru
        _
    $region6: #{tpu_custom_call.1} parent=1 // loop_footer
      %s18 = sadd.s32 1, %s14
    $region7: #{tpu_custom_call.1} parent=1 // loop_footer_branch
      %13 = sbr.rel target = $region3
    $region8: #{tpu_custom_call.1} parent=1 // loop_exit
      _
    %303 = vsyncpa [#allocation4], 1
    %s304 = scalar_lea.sflag [#allocation4], 1
    %305 = vsyncpa %s304, 1
    %306 = vsyncpa [#allocation6], 1
    %s307 = scalar_lea.sflag [#allocation6], 1
    %308 = vsyncpa %s307, 1

</llo_original>
